<compile_context>
chip_gen: v6e
topology: v6e:2x2x1
jax: 0.10.0
libtpu: 0.0.40
codegen_flags: <defaults>
</compile_context>

<pallas_src>
import functools

import jax
import jax.numpy as jnp
from jax.experimental import pallas as pl
from jax.experimental.pallas import tpu as pltpu


def _round_up(x, m):
    return (x + m - 1) // m * m


# ---------------------------------------------------------------------------
# Pallas kernel: whole forward pass on one VMEM-resident (TB, *) block.
#   ma_ref  : (1, 1)            f32   SMEM   max_action
#   x_ref   : (TB, k1)          bf16  VMEM   [o | a | latent_bcast | 0-pad]
#   wp_ref  : (rows, 3*hidden)  bf16  VMEM   packed weights (block-diag W1, Wfc, Wout)
#   bp_ref  : (8, 3*hidden)     f32   VMEM   packed biases
#   out_ref : (TB, 128)         f32   VMEM   lane-dense padded output
# ---------------------------------------------------------------------------
def _policy_kernel(ma_ref, x_ref, wp_ref, bp_ref, out_ref, *,
                   k1, s2, s3, hidden, out_pad):
    max_action = ma_ref[0, 0]

    # --- fused input projections: one (TB, k1) @ (k1, 3*hidden) matmul -------
    x = x_ref[...]                                        # (TB, k1)  bf16
    w1 = wp_ref[0:k1, :]                                  # (k1, 3h)  bf16 (block-diag)
    b1 = bp_ref[0:1, :]                                   # (1, 3h)   f32  [b_o|b_a|b_n]
    h1 = jnp.dot(x, w1, preferred_element_type=jnp.float32) + b1

    hsa = (jnp.maximum(h1[:, 0:hidden], 0.0)
           + jnp.maximum(h1[:, hidden:2 * hidden], 0.0)
           + jnp.maximum(h1[:, 2 * hidden:3 * hidden], 0.0))   # (TB, h) f32

    # --- hidden layer ---------------------------------------------------------
    wfc = wp_ref[s2:s2 + hidden, 0:hidden]                # (h, h)  bf16
    bfc = bp_ref[1:2, 0:hidden]                           # (1, h)  f32
    xh = jnp.maximum(
        jnp.dot(hsa.astype(jnp.bfloat16), wfc,
                preferred_element_type=jnp.float32) + bfc, 0.0)

    # --- output layer (lane-padded to 128) -------------------------------------
    wout = wp_ref[s3:s3 + hidden, 0:out_pad]              # (h, 128) bf16 (zero-padded)
    bout = bp_ref[2:3, 0:out_pad]                         # (1, 128) f32
    logits = jnp.dot(xh.astype(jnp.bfloat16), wout,
                     preferred_element_type=jnp.float32) + bout
    out_ref[...] = max_action * jnp.tanh(logits)


# ---------------------------------------------------------------------------
# Wrapper: param packing + padding + pallas_call.
# ---------------------------------------------------------------------------
def pack_params(params, hidden, out_pad):
    """Pack all weights into one bf16 buffer and all biases into one f32 buffer."""
    w_o, w_a, w_n = params["w_o"], params["w_a"], params["w_n"]
    w_fc, w_out = params["w_fc"], params["w_out"]
    obs = w_o.shape[0]
    act = w_a.shape[0]
    out_dim = w_out.shape[1]
    in_total = obs + act + obs
    lanes = 3 * hidden
    assert out_pad <= lanes and out_dim <= out_pad

    k1 = _round_up(in_total, 16)           # bf16 sublane-aligned sections
    s2 = k1
    s3 = _round_up(s2 + hidden, 16)
    rows = _round_up(s3 + hidden, 16)

    wp = jnp.zeros((rows, lanes), jnp.float32)
    # block-diagonal first layer: [w_o | w_a | w_n] on the lane axis
    wp = wp.at[0:obs, 0:hidden].set(w_o)
    wp = wp.at[obs:obs + act, hidden:2 * hidden].set(w_a)
    wp = wp.at[obs + act:in_total, 2 * hidden:3 * hidden].set(w_n)
    wp = wp.at[s2:s2 + hidden, 0:hidden].set(w_fc)
    wp = wp.at[s3:s3 + hidden, 0:out_dim].set(w_out)      # zero-pad to 128 lanes

    bp = jnp.zeros((8, lanes), jnp.float32)
    bp = bp.at[0, 0:hidden].set(params["b_o"][0])
    bp = bp.at[0, hidden:2 * hidden].set(params["b_a"][0])
    bp = bp.at[0, 2 * hidden:3 * hidden].set(params["b_n"][0])
    bp = bp.at[1, 0:hidden].set(params["b_fc"][0])
    bp = bp.at[2, 0:out_dim].set(params["b_out"][0])

    meta = dict(k1=k1, s2=s2, s3=s3, rows=rows, lanes=lanes, in_total=in_total)
    return wp.astype(jnp.bfloat16), bp, meta


def opponent_conditional_policy(o, a, latent, params, max_action,
                                *, hidden=64, out_pad=128):
    """o: (B, obs), a: (B, act), latent: (1, obs), params: dict of (in,out) W / (1,out) b."""
    B = o.shape[0]
    out_dim = params["w_out"].shape[1]

    wp, bp, meta = pack_params(params, hidden, out_pad)
    k1 = meta["k1"]

    # Fused activation block: [o | a | broadcast(latent)] zero-padded to k1 lanes.
    lat_b = jnp.broadcast_to(latent, (B, latent.shape[1]))
    x = jnp.concatenate([o, a, lat_b], axis=1)                       # (B, in_total) f32

    # Batch tiling: 16-aligned tile, "parallel" grid axis over batch.
    tb = 256 if B >= 256 else _round_up(max(B, 1), 16)
    b_pad = _round_up(B, tb)
    x = jnp.pad(x, ((0, b_pad - B), (0, k1 - x.shape[1]))).astype(jnp.bfloat16)

    ma = jnp.full((1, 1), max_action, jnp.float32)                   # SMEM scalar

    kernel = functools.partial(
        _policy_kernel, k1=k1, s2=meta["s2"], s3=meta["s3"],
        hidden=hidden, out_pad=out_pad)

    out = pl.pallas_call(
        kernel,
        out_shape=jax.ShapeDtypeStruct((b_pad, out_pad), jnp.float32),
        grid=(b_pad // tb,),
        in_specs=[
            pl.BlockSpec((1, 1), lambda i: (0, 0),
                         memory_space=pltpu.MemorySpace.SMEM),
            pl.BlockSpec((tb, k1), lambda i: (i, 0)),
            pl.BlockSpec((meta["rows"], meta["lanes"]), lambda i: (0, 0)),
            pl.BlockSpec((8, meta["lanes"]), lambda i: (0, 0)),
        ],
        out_specs=pl.BlockSpec((tb, out_pad), lambda i: (i, 0)),
        compiler_params=pltpu.CompilerParams(
            dimension_semantics=("parallel",)),
    )(ma, x, wp, bp)

    return out[:B, :out_dim]


# ---------------------------------------------------------------------------
# References.
# ---------------------------------------------------------------------------
def reference_mixed(o, a, latent, params, max_action):
    """Mirrors the kernel's mixed precision (bf16 matmul operands, f32 everything else)."""
    bf = lambda z: z.astype(jnp.bfloat16)
    B = o.shape[0]
    lat = jnp.broadcast_to(latent, (B, latent.shape[1]))

    def dot(xx, w):
        return jnp.dot(bf(xx), bf(w), preferred_element_type=jnp.float32)

    ho = jax.nn.relu(dot(o, params["w_o"]) + params["b_o"])
    ha = jax.nn.relu(dot(a, params["w_a"]) + params["b_a"])
    hn = jax.nn.relu(dot(lat, params["w_n"]) + params["b_n"])
    hsa = ho + ha + hn
    xh = jax.nn.relu(dot(hsa, params["w_fc"]) + params["b_fc"])
    return max_action * jnp.tanh(dot(xh, params["w_out"]) + params["b_out"])


def reference_f32(o, a, latent, params, max_action):
    """Exact PyTorch-equivalent f32 forward (same latent)."""
    B = o.shape[0]
    lat = jnp.broadcast_to(latent, (B, latent.shape[1]))
    ho = jax.nn.relu(o @ params["w_o"] + params["b_o"])
    ha = jax.nn.relu(a @ params["w_a"] + params["b_a"])
    hn = jax.nn.relu(lat @ params["w_n"] + params["b_n"])
    hsa = ho + ha + hn
    xh = jax.nn.relu(hsa @ params["w_fc"] + params["b_fc"])
    return max_action * jnp.tanh(xh @ params["w_out"] + params["b_out"])


def init_params(key, obs_dim, act_dim, hidden, out_dim):
    """Deterministic synthetic init (PyTorch-Linear-style uniform bounds)."""
    def linear(k, fan_in, fan_out):
        k1, k2 = jax.random.split(k)
        bound = 1.0 / jnp.sqrt(fan_in)
        w = jax.random.uniform(k1, (fan_in, fan_out), jnp.float32, -bound, bound)
        b = jax.random.uniform(k2, (1, fan_out), jnp.float32, -bound, bound)
        return w, b

    keys = jax.random.split(key, 5)
    w_o, b_o = linear(keys[0], obs_dim, hidden)      # fco
    w_a, b_a = linear(keys[1], act_dim, hidden)      # fca
    w_n, b_n = linear(keys[2], obs_dim, hidden)      # fcn
    w_fc, b_fc = linear(keys[3], hidden, hidden)     # fc
    w_out, b_out = linear(keys[4], hidden, out_dim)  # out
    return dict(w_o=w_o, b_o=b_o, w_a=w_a, b_a=b_a, w_n=w_n, b_n=b_n,
                w_fc=w_fc, b_fc=b_fc, w_out=w_out, b_out=b_out)


if __name__ == "__main__":
    # Shapes consistent with the module's forward:
    #   obs_shape = 8, action_shape = 4, n_agents = 3 -> out_dim = 4*(3-1) = 8
    batch = 2
    obs_dim = 8
    act_dim = 4
    n_agents = 3
    hidden = 64
    out_dim = act_dim * (n_agents - 1)
    max_action = 1.0

    root = jax.random.PRNGKey(0)
    k_params, k_o, k_a, k_lat = jax.random.split(root, 4)

    params = init_params(k_params, obs_dim, act_dim, hidden, out_dim)

    o = jax.random.normal(k_o, (batch, obs_dim), jnp.float32)
    a = jax.random.normal(k_a, (batch, act_dim), jnp.float32)
    # latent = Normal(0,1).sample() of shape (obs_dim,), unsqueezed to (1, obs_dim)
    latent = jax.random.normal(k_lat, (1, obs_dim), jnp.float32)

    actions = opponent_conditional_policy(o, a, latent, params, max_action,
                                          hidden=hidden)
    actions = jax.block_until_ready(actions)
    assert actions.shape == (batch, out_dim), actions.shape

    # Tight check against a reference using the kernel's exact mixed precision.
    ref_m = reference_mixed(o, a, latent, params, max_action)
    err_m = jnp.max(jnp.abs(actions - ref_m))
    assert jnp.allclose(actions, ref_m, atol=1e-4, rtol=1e-4), err_m

    # Loose sanity check against the full-f32 PyTorch-equivalent forward
    # (difference is only the bf16 rounding of matmul operands).
    ref_f = reference_f32(o, a, latent, params, max_action)
    err_f = jnp.max(jnp.abs(actions - ref_f))
    assert jnp.allclose(actions, ref_f, atol=5e-2), err_f

    print("KERNEL_OK")
</pallas_src>

<mosaic_0001>
module attributes {stable_mosaic.version = 11 : i64} {
  func.func @_policy_kernel(%arg0: i32, %arg1: memref<1x1xf32, #tpu.memory_space<smem>>, %arg2: memref<16x32xbf16, #tpu.memory_space<vmem>>, %arg3: memref<160x192xbf16, #tpu.memory_space<vmem>>, %arg4: memref<8x192xf32, #tpu.memory_space<vmem>>, %arg5: memref<16x128xf32, #tpu.memory_space<vmem>>) attributes {dimension_semantics = [#tpu.dimension_semantics<parallel>], iteration_bounds = array<i64: 1>, scalar_prefetch = 0 : i64, scratch_operands = 0 : i64, tpu.core_type = #tpu.core_type<tc>, window_params = [{transform_indices = @transform_0, window_bounds = array<i64: 1, 1>}, {transform_indices = @transform_1, window_bounds = array<i64: 16, 32>}, {pipeline_mode = #tpu.pipeline_mode<synchronous>, transform_indices = @transform_2, window_bounds = array<i64: 160, 192>}, {pipeline_mode = #tpu.pipeline_mode<synchronous>, transform_indices = @transform_3, window_bounds = array<i64: 8, 192>}, {transform_indices = @transform_4, window_bounds = array<i64: 16, 128>}]} {
    %c0 = arith.constant 0 : index
    %c0_0 = arith.constant 0 : index
    %0 = memref.load %arg1[%c0, %c0_0] : memref<1x1xf32, #tpu.memory_space<smem>>
    %c0_1 = arith.constant 0 : index
    %c0_2 = arith.constant 0 : index
    %1 = vector.load %arg2[%c0_1, %c0_2] : memref<16x32xbf16, #tpu.memory_space<vmem>>, vector<16x32xbf16>
    %c0_3 = arith.constant 0 : index
    %c0_4 = arith.constant 0 : index
    %2 = vector.load %arg3[%c0_3, %c0_4] : memref<160x192xbf16, #tpu.memory_space<vmem>>, vector<32x192xbf16>
    %c0_5 = arith.constant 0 : index
    %c0_6 = arith.constant 0 : index
    %3 = vector.load %arg4[%c0_5, %c0_6] : memref<8x192xf32, #tpu.memory_space<vmem>>, vector<1x192xf32>
    %cst = arith.constant dense<0.000000e+00> : vector<16x192xf32>
    %4 = tpu.matmul %1, %2, %cst {dimension_numbers = #tpu.dot_dimension_numbers<[1], [0], [0], [1], [0, 0, 1, 1], [], []>} : vector<16x32xbf16>, vector<32x192xbf16>, vector<16x192xf32> -> vector<16x192xf32>
    %5 = vector.broadcast %3 : vector<1x192xf32> to vector<16x192xf32>
    %6 = arith.addf %4, %5 : vector<16x192xf32>
    %7 = vector.extract_strided_slice %6 {offsets = [0, 0], sizes = [16, 64], strides = [1, 1]} : vector<16x192xf32> to vector<16x64xf32>
    %cst_7 = arith.constant 0.000000e+00 : f32
    %8 = vector.broadcast %cst_7 : f32 to vector<16x64xf32>
    %9 = arith.maximumf %7, %8 : vector<16x64xf32>
    %10 = vector.extract_strided_slice %6 {offsets = [0, 64], sizes = [16, 64], strides = [1, 1]} : vector<16x192xf32> to vector<16x64xf32>
    %cst_8 = arith.constant 0.000000e+00 : f32
    %11 = vector.broadcast %cst_8 : f32 to vector<16x64xf32>
    %12 = arith.maximumf %10, %11 : vector<16x64xf32>
    %13 = arith.addf %9, %12 : vector<16x64xf32>
    %14 = vector.extract_strided_slice %6 {offsets = [0, 128], sizes = [16, 64], strides = [1, 1]} : vector<16x192xf32> to vector<16x64xf32>
    %cst_9 = arith.constant 0.000000e+00 : f32
    %15 = vector.broadcast %cst_9 : f32 to vector<16x64xf32>
    %16 = arith.maximumf %14, %15 : vector<16x64xf32>
    %17 = arith.addf %13, %16 : vector<16x64xf32>
    %c32 = arith.constant 32 : index
    %c0_10 = arith.constant 0 : index
    %18 = vector.load %arg3[%c32, %c0_10] : memref<160x192xbf16, #tpu.memory_space<vmem>>, vector<64x64xbf16>
    %c1 = arith.constant 1 : index
    %c0_11 = arith.constant 0 : index
    %19 = vector.load %arg4[%c1, %c0_11] : memref<8x192xf32, #tpu.memory_space<vmem>>, vector<1x64xf32>
    %20 = arith.truncf %17 : vector<16x64xf32> to vector<16x64xbf16>
    %cst_12 = arith.constant dense<0.000000e+00> : vector<16x64xf32>
    %21 = tpu.matmul %20, %18, %cst_12 {dimension_numbers = #tpu.dot_dimension_numbers<[1], [0], [0], [1], [0, 0, 1, 1], [], []>} : vector<16x64xbf16>, vector<64x64xbf16>, vector<16x64xf32> -> vector<16x64xf32>
    %22 = vector.broadcast %19 : vector<1x64xf32> to vector<16x64xf32>
    %23 = arith.addf %21, %22 : vector<16x64xf32>
    %cst_13 = arith.constant 0.000000e+00 : f32
    %24 = vector.broadcast %cst_13 : f32 to vector<16x64xf32>
    %25 = arith.maximumf %23, %24 : vector<16x64xf32>
    %c96 = arith.constant 96 : index
    %c0_14 = arith.constant 0 : index
    %26 = vector.load %arg3[%c96, %c0_14] : memref<160x192xbf16, #tpu.memory_space<vmem>>, vector<64x128xbf16>
    %c2 = arith.constant 2 : index
    %c0_15 = arith.constant 0 : index
    %27 = vector.load %arg4[%c2, %c0_15] : memref<8x192xf32, #tpu.memory_space<vmem>>, vector<1x128xf32>
    %28 = arith.truncf %25 : vector<16x64xf32> to vector<16x64xbf16>
    %cst_16 = arith.constant dense<0.000000e+00> : vector<16x128xf32>
    %29 = tpu.matmul %28, %26, %cst_16 {dimension_numbers = #tpu.dot_dimension_numbers<[1], [0], [0], [1], [0, 0, 1, 1], [], []>} : vector<16x64xbf16>, vector<64x128xbf16>, vector<16x128xf32> -> vector<16x128xf32>
    %30 = vector.broadcast %27 : vector<1x128xf32> to vector<16x128xf32>
    %31 = arith.addf %29, %30 : vector<16x128xf32>
    %32 = math.tanh %31 : vector<16x128xf32>
    %33 = vector.broadcast %0 : f32 to vector<16x128xf32>
    %34 = arith.mulf %33, %32 : vector<16x128xf32>
    %c0_17 = arith.constant 0 : index
    %c0_18 = arith.constant 0 : index
    %35 = vector.load %arg5[%c0_17, %c0_18] : memref<16x128xf32, #tpu.memory_space<vmem>>, vector<16x128xf32>
    tpu.vector_store %arg5[%c0_17, %c0_18], %34 {strides = array<i32>} : memref<16x128xf32, #tpu.memory_space<vmem>>, vector<16x128xf32>,
    return
  }
  func.func @transform_0(%arg0: i32) -> (i32, i32) {
    %c0_i32 = arith.constant 0 : i32
    %c0_i32_0 = arith.constant 0 : i32
    %c0_i32_1 = arith.constant 0 : i32
    return %c0_i32, %c0_i32_0 : i32, i32
  }
  func.func @transform_1(%arg0: i32) -> (i32, i32) {
    %c0_i32 = arith.constant 0 : i32
    %c0_i32_0 = arith.constant 0 : i32
    return %arg0, %c0_i32 : i32, i32
  }
  func.func @transform_2(%arg0: i32) -> (i32, i32) {
    %c0_i32 = arith.constant 0 : i32
    %c0_i32_0 = arith.constant 0 : i32
    %c0_i32_1 = arith.constant 0 : i32
    return %c0_i32, %c0_i32_0 : i32, i32
  }
  func.func @transform_3(%arg0: i32) -> (i32, i32) {
    %c0_i32 = arith.constant 0 : i32
    %c0_i32_0 = arith.constant 0 : i32
    %c0_i32_1 = arith.constant 0 : i32
    return %c0_i32, %c0_i32_0 : i32, i32
  }
  func.func @transform_4(%arg0: i32) -> (i32, i32) {
    %c0_i32 = arith.constant 0 : i32
    %c0_i32_0 = arith.constant 0 : i32
    return %arg0, %c0_i32 : i32, i32
  }
}

</mosaic_0001>

<llo_original>
// kernel: tpu_custom_call.1
$region0: #{tpu_custom_call.1}
  #allocation0 [shape = 'u32[]', space=smem, size = 0x4, offset = 0x4, fixed_abs, tag = 'smem constant byte address 0x4 - core index']
  #allocation1 [shape = 'u32[144,128]{1,0:T(1,128)}', space=vmem, size = 0x12000, scoped, tag = 'internal scratch']
  #allocation2 [shape = 'f32[1,1]{1,0:T(1,128)S(6)}', space=smem, size = 0x200, scoped, tag = 'scoped memory for tpu_custom_call.1']
  %s0 = inlined_call_operand.<no memory space> [shape: f32[1,1], index: 0, kind: input, shape index: {}]
  %s1 = inlined_call_operand.hbm [shape: bf16[16,32], index: 1, kind: input, shape index: {}]
  %s2 = inlined_call_operand.hbm [shape: bf16[160,192], index: 2, kind: input, shape index: {}]
  %s3 = inlined_call_operand.hbm [shape: f32[8,192], index: 3, kind: input, shape index: {}]
  %s4 = inlined_call_operand.hbm [shape: f32[16,128], index: 4, kind: output, shape index: {}]
  %s5 = sld [smem:[#allocation0]]
  $region38: #{tpu_custom_call.1} parent=0
    _
  %s7 = ssub.s32 1, %s5
  %s8 = scalar_select 0, %s7, %s5
  %9 = sst [smem:[#allocation2]] %s0
  $region1: #{tpu_custom_call.1} parent=0
    #allocation3 [shape = 'u8[4096]{0}', space=vmem, size = 0x1000, scoped, tag = 'input window, operand 1, single buffered']
    #allocation4 [shape = 's32[1]{0}', space=sflag, size = 0x4, scoped, tag = 'scoped memory for tpu_custom_call.1']
    #allocation5 [shape = 's32[1]{0}', space=sflag, size = 0x4, scoped, tag = 'scoped memory for tpu_custom_call.1']
    #allocation6 [shape = 'u8[81920]{0}', space=vmem, size = 0x14000, scoped, tag = 'input window, operand 2, single buffered']
    #allocation7 [shape = 's32[1]{0}', space=sflag, size = 0x4, scoped, tag = 'scoped memory for tpu_custom_call.1']
    #allocation8 [shape = 'u8[8192]{0}', space=vmem, size = 0x2000, scoped, tag = 'input window, operand 3, single buffered']
    #allocation9 [shape = 'u8[8192]{0}', space=vmem, size = 0x2000, scoped, tag = 'output window, operand 0, single buffered']
    %10 = vsyncpa [#allocation4], 0
    %11 = vsyncpa [#allocation7], 0
    %12 = vsyncpa [#allocation5], 0
    // Predicated region
    $region2: #{tpu_custom_call.1} parent=1 // pred_check
      _
    $region3: #{tpu_custom_call.1} parent=1 // pred_check_branch
      %14 = sbr.rel (0) target = $region5
    $region4: #{tpu_custom_call.1} parent=1 // pred_region
      _
    $region5: #{tpu_custom_call.1} parent=1 // pred_fallthru
      _
    // Predicated region
    $region6: #{tpu_custom_call.1} parent=1 // pred_check
      _
    $region7: #{tpu_custom_call.1} parent=1 // pred_check_branch
      %16 = sbr.rel (0) target = $region9
    $region8: #{tpu_custom_call.1} parent=1 // pred_region
      %s18 = ssub.s32 128, 128
      %19 = vsyncadd [#allocation4], %s18
      %s20 = sshll.u32 [#allocation3], 4
      %s21 = int_to_ptr.vmem [resolvable:$true] %s20
      %26 = dma.hbm_to_vmem [thread:$0]  %s1, 128, %s21, [#allocation4], 64, 64, 4
    $region9: #{tpu_custom_call.1} parent=1 // pred_fallthru
      _
    // Predicated region
    $region10: #{tpu_custom_call.1} parent=1 // pred_check
      _
    $region11: #{tpu_custom_call.1} parent=1 // pred_check_branch
      %28 = sbr.rel (0) target = $region13
    $region12: #{tpu_custom_call.1} parent=1 // pred_region
      %s30 = ssub.s32 2560, 2560
      %31 = vsyncadd [#allocation7], %s30
      %s32 = sshll.u32 [#allocation6], 4
      %s33 = int_to_ptr.vmem [resolvable:$true] %s32
      %38 = dma.hbm_to_vmem [thread:$0]  %s2, 2560, %s33, [#allocation7], 128, 128, 8
    $region13: #{tpu_custom_call.1} parent=1 // pred_fallthru
      _
    // Predicated region
    $region14: #{tpu_custom_call.1} parent=1 // pred_check
      _
    $region15: #{tpu_custom_call.1} parent=1 // pred_check_branch
      %40 = sbr.rel (0) target = $region17
    $region16: #{tpu_custom_call.1} parent=1 // pred_region
      %s42 = ssub.s32 256, 256
      %43 = vsyncadd [#allocation7], %s42
      %s45 = sshll.u32 [#allocation8], 4
      %s46 = int_to_ptr.vmem [resolvable:$true] %s45
      %48 = dma.hbm_to_vmem [thread:$0]  %s3, 256, %s46, [#allocation7]
    $region17: #{tpu_custom_call.1} parent=1 // pred_fallthru
      _
    // Predicated region
    $region18: #{tpu_custom_call.1} parent=1 // pred_check
      _
    $region19: #{tpu_custom_call.1} parent=1 // pred_check_branch
      %50 = sbr.rel (0) target = $region21
    $region20: #{tpu_custom_call.1} parent=1 // pred_region
      %51 = dma.done [#allocation4], 128
    $region21: #{tpu_custom_call.1} parent=1 // pred_fallthru
      _
    // Predicated region
    $region22: #{tpu_custom_call.1} parent=1 // pred_check
      _
    $region23: #{tpu_custom_call.1} parent=1 // pred_check_branch
      %53 = sbr.rel (0) target = $region25
    $region24: #{tpu_custom_call.1} parent=1 // pred_region
      %54 = dma.done [#allocation7], 2560
    $region25: #{tpu_custom_call.1} parent=1 // pred_fallthru
      _
    // Predicated region
    $region26: #{tpu_custom_call.1} parent=1 // pred_check
      _
    $region27: #{tpu_custom_call.1} parent=1 // pred_check_branch
      %56 = sbr.rel (0) target = $region29
    $region28: #{tpu_custom_call.1} parent=1 // pred_region
      %57 = dma.done [#allocation7], 256
    $region29: #{tpu_custom_call.1} parent=1 // pred_fallthru
      _
    %s59 = sld [smem:[#allocation2]]
    %v60 = vld [vmem:[#allocation3] sm:$0xf]
    %v61 = vld [vmem:[#allocation3 + $0x4] sm:$0xf]
    %v62 = vld [vmem:[#allocation6] sm:$0xff]
    %v63 = vld [vmem:[#allocation6 + $0x8] sm:$0xff]
    %v64 = vld [vmem:[#allocation6 + $0x10] sm:$0xff]
    %v65 = vld [vmem:[#allocation6 + $0x18] sm:$0xff]
    %v66 = vld [vmem:[#allocation8] ss:$8 sm:$0x3]
    %v68 = vlaneseq
    %v69 = vshrl.u32 %v68, 7
    %v70 = vsub.s32 0, %v69
    %v71 = vrot.slane %v66, %v70
    %v72 = vlaneseq
    %v73 = vshrl.u32 %v72, 7
    %v74 = vsub.s32 1, %v73
    %v75 = vrot.slane %v66, %v74
    %v80 = vunpack.c.l.b16 %v60
    %v81 = vunpack.c.l.b16 %v61
    %v82 = vpack.c.b16 %v81, %v80
    %v87 = vunpack.c.l.b16 %v62
    %v88 = vunpack.c.h.b16 %v62
    %v89 = vunpack.c.l.b16 %v63
    %v90 = vunpack.c.h.b16 %v63
    %v91 = vunpack.c.l.b16 %v64
    %v92 = vunpack.c.h.b16 %v64
    %v93 = vunpack.c.l.b16 %v65
    %v94 = vunpack.c.h.b16 %v65
    %v95 = vpack.c.b16 %v89, %v87
    %v96 = vpack.c.b16 %v90, %v88
    %v97 = vpack.c.b16 %v93, %v91
    %v98 = vpack.c.b16 %v94, %v92
    %vm103 = vcmask 261120
    %v105 = vsel %vm103, %v82, 0
    %107 = vmatprep.subr.bf16.mxu0 0
    %108 = vmatpush1.bf16.msra.mxu0 0
    %109 = vmatprep.subr.bf16.mxu0 0
    %110 = vmatpush1.bf16.msra.mxu0 0
    %111 = vmatprep.subr.bf16.mxu0 0
    %112 = vmatpush1.bf16.msra.mxu0 0
    %113 = vmatprep.subr.bf16.mxu0 0
    %114 = vmatpush1.bf16.msra.mxu0 0
    %115 = vmatprep.subr.bf16.mxu0 0
    %116 = vmatpush1.bf16.msra.mxu0 0
    %117 = vmatprep.subr.bf16.mxu0 0
    %118 = vmatpush1.bf16.msra.mxu0 0
    %119 = vmatprep.subr.bf16.mxu0 %v98
    %120 = vmatpush1.bf16.msra.mxu0 %v97
    %121 = vmatprep.subr.bf16.mxu0 %v96
    %122 = vmatpush1.bf16.msra.mxu0 %v95
    %123 = vmatprep.subr.bf16.mxu0 0
    %124 = vmatpush2.bf16.msra.mxu0 0
    %125 = vmatprep.subr.bf16.mxu0 0
    %126 = vmatpush2.bf16.msra.mxu0 0
    %127 = vmatprep.subr.bf16.mxu0 0
    %128 = vmatpush2.bf16.msra.mxu0 0
    %129 = vmatprep.subr.bf16.mxu0 0
    %130 = vmatpush2.bf16.msra.mxu0 0
    %131 = vmatprep.subr.bf16.mxu0 0
    %132 = vmatpush2.bf16.msra.mxu0 0
    %133 = vmatprep.subr.bf16.mxu0 0
    %134 = vmatpush2.bf16.msra.mxu0 0
    %135 = vmatprep.subr.bf16.mxu0 0
    %136 = vmatpush2.bf16.msra.mxu0 0
    %137 = vmatprep.subr.bf16.mxu0 0
    %138 = vmatpush2.bf16.msra.mxu0 0
    %139 = vmatprep.mubr.bf16.mxu0 0
    %140 = vmatmul.mubr.bf16.gmra.mxu0 %v105
    %v141 = vpop.f32.mrf.mxu0
    %v142 = vadd.f32 %v71, %v141
    %v143 = vpop.f32.mrf.mxu0
    %v144 = vadd.f32 %v75, %v143
    %v145 = vpop.f32.mrf.mxu0
    %v146 = vadd.f32 %v71, %v145
    %v147 = vpop.f32.mrf.mxu0
    %v148 = vadd.f32 %v75, %v147
    %149 = vdwg.mxu0
    %v150 = vmax.f32 %v142, 0.0
    %v151 = vmax.f32 %v146, 0.0
    %154 = vrot.lane.b32.xlu0 %v150, 64
    %v155 = vpop.permute.xlu0 %154
    %156 = vrot.lane.b32.xlu0 %v151, 64
    %v157 = vpop.permute.xlu0 %156
    %v160 = vadd.f32 %v150, %v155
    %v161 = vadd.f32 %v151, %v157
    %v162 = vmax.f32 %v144, 0.0
    %v163 = vmax.f32 %v148, 0.0
    %v164 = vadd.f32 %v160, %v162
    %v165 = vadd.f32 %v161, %v163
    %v166 = vld [vmem:[#allocation6 + $0x20] sm:$0xf]
    %v167 = vld [vmem:[#allocation6 + $0x28] sm:$0xf]
    %v168 = vld [vmem:[#allocation6 + $0x30] sm:$0xf]
    %v169 = vld [vmem:[#allocation6 + $0x38] sm:$0xf]
    %v170 = vld [vmem:[#allocation6 + $0x40] sm:$0xf]
    %v171 = vld [vmem:[#allocation6 + $0x48] sm:$0xf]
    %v172 = vld [vmem:[#allocation6 + $0x50] sm:$0xf]
    %v173 = vld [vmem:[#allocation6 + $0x58] sm:$0xf]
    %v174 = vld [vmem:[#allocation8 + $0x1] ss:$0 sm:$0xff]
    %v175 = vpack.c.bf16 %v165, %v164
    %v184 = vunpack.c.l.b16 %v166
    %v185 = vunpack.c.l.b16 %v167
    %v186 = vunpack.c.l.b16 %v168
    %v187 = vunpack.c.l.b16 %v169
    %v188 = vunpack.c.l.b16 %v170
    %v189 = vunpack.c.l.b16 %v171
    %v190 = vunpack.c.l.b16 %v172
    %v191 = vunpack.c.l.b16 %v173
    %v192 = vpack.c.b16 %v185, %v184
    %v193 = vpack.c.b16 %v187, %v186
    %v194 = vpack.c.b16 %v189, %v188
    %v195 = vpack.c.b16 %v191, %v190
    %vm200 = vcmask 523264
    %v202 = vsel %vm200, %v175, 0
    %204 = vmatprep.subr.bf16.mxu0 0
    %205 = vmatpush1.bf16.msra.mxu0 0
    %206 = vmatprep.subr.bf16.mxu0 0
    %207 = vmatpush1.bf16.msra.mxu0 0
    %208 = vmatprep.subr.bf16.mxu0 0
    %209 = vmatpush1.bf16.msra.mxu0 0
    %210 = vmatprep.subr.bf16.mxu0 0
    %211 = vmatpush1.bf16.msra.mxu0 0
    %212 = vmatprep.subr.bf16.mxu0 0
    %213 = vmatpush1.bf16.msra.mxu0 %v195
    %214 = vmatprep.subr.bf16.mxu0 0
    %215 = vmatpush1.bf16.msra.mxu0 %v194
    %216 = vmatprep.subr.bf16.mxu0 0
    %217 = vmatpush1.bf16.msra.mxu0 %v193
    %218 = vmatprep.subr.bf16.mxu0 0
    %219 = vmatpush1.bf16.msra.mxu0 %v192
    %220 = vmatprep.subr.bf16.mxu0 0
    %221 = vmatpush2.bf16.msra.mxu0 0
    %222 = vmatprep.subr.bf16.mxu0 0
    %223 = vmatpush2.bf16.msra.mxu0 0
    %224 = vmatprep.subr.bf16.mxu0 0
    %225 = vmatpush2.bf16.msra.mxu0 0
    %226 = vmatprep.subr.bf16.mxu0 0
    %227 = vmatpush2.bf16.msra.mxu0 0
    %228 = vmatprep.subr.bf16.mxu0 0
    %229 = vmatpush2.bf16.msra.mxu0 0
    %230 = vmatprep.subr.bf16.mxu0 0
    %231 = vmatpush2.bf16.msra.mxu0 0
    %232 = vmatprep.subr.bf16.mxu0 0
    %233 = vmatpush2.bf16.msra.mxu0 0
    %234 = vmatprep.subr.bf16.mxu0 0
    %235 = vmatpush2.bf16.msra.mxu0 0
    %236 = vmatprep.mubr.bf16.mxu0 0
    %237 = vmatmul.mubr.bf16.gmra.mxu0 %v202
    %v238 = vpop.f32.mrf.mxu0
    %v239 = vadd.f32 %v174, %v238
    %v240 = vpop.f32.mrf.mxu0
    %v241 = vpop.f32.mrf.mxu0
    %v242 = vadd.f32 %v174, %v241
    %v243 = vpop.f32.mrf.mxu0
    %244 = vdwg.mxu0
    %v245 = vmax.f32 %v239, 0.0
    %v246 = vmax.f32 %v242, 0.0
    %v247 = vld [vmem:[#allocation6 + $0x60] sm:$0xf]
    %v248 = vld [vmem:[#allocation6 + $0x68] sm:$0xf]
    %v249 = vld [vmem:[#allocation6 + $0x70] sm:$0xf]
    %v250 = vld [vmem:[#allocation6 + $0x78] sm:$0xf]
    %v251 = vld [vmem:[#allocation6 + $0x80] sm:$0xf]
    %v252 = vld [vmem:[#allocation6 + $0x88] sm:$0xf]
    %v253 = vld [vmem:[#allocation6 + $0x90] sm:$0xf]
    %v254 = vld [vmem:[#allocation6 + $0x98] sm:$0xf]
    %v255 = vld [vmem:[#allocation8 + $0x2] ss:$0 sm:$0xff]
    %v256 = vpack.c.bf16 %v246, %v245
    %v265 = vunpack.c.l.b16 %v247
    %v266 = vunpack.c.l.b16 %v248
    %v267 = vunpack.c.l.b16 %v249
    %v268 = vunpack.c.l.b16 %v250
    %v269 = vunpack.c.l.b16 %v251
    %v270 = vunpack.c.l.b16 %v252
    %v271 = vunpack.c.l.b16 %v253
    %v272 = vunpack.c.l.b16 %v254
    %v273 = vpack.c.b16 %v266, %v265
    %v274 = vpack.c.b16 %v268, %v267
    %v275 = vpack.c.b16 %v270, %v269
    %v276 = vpack.c.b16 %v272, %v271
    %v282 = vsel %vm200, %v256, 0
    %284 = vmatprep.subr.bf16.mxu0 0
    %285 = vmatpush1.bf16.msra.mxu0 0
    %286 = vmatprep.subr.bf16.mxu0 0
    %287 = vmatpush1.bf16.msra.mxu0 0
    %288 = vmatprep.subr.bf16.mxu0 0
    %289 = vmatpush1.bf16.msra.mxu0 0
    %290 = vmatprep.subr.bf16.mxu0 0
    %291 = vmatpush1.bf16.msra.mxu0 0
    %292 = vmatprep.subr.bf16.mxu0 0
    %293 = vmatpush1.bf16.msra.mxu0 %v276
    %294 = vmatprep.subr.bf16.mxu0 0
    %295 = vmatpush1.bf16.msra.mxu0 %v275
    %296 = vmatprep.subr.bf16.mxu0 0
    %297 = vmatpush1.bf16.msra.mxu0 %v274
    %298 = vmatprep.subr.bf16.mxu0 0
    %299 = vmatpush1.bf16.msra.mxu0 %v273
    %300 = vmatprep.subr.bf16.mxu0 0
    %301 = vmatpush2.bf16.msra.mxu0 0
    %302 = vmatprep.subr.bf16.mxu0 0
    %303 = vmatpush2.bf16.msra.mxu0 0
    %304 = vmatprep.subr.bf16.mxu0 0
    %305 = vmatpush2.bf16.msra.mxu0 0
    %306 = vmatprep.subr.bf16.mxu0 0
    %307 = vmatpush2.bf16.msra.mxu0 0
    %308 = vmatprep.subr.bf16.mxu0 0
    %309 = vmatpush2.bf16.msra.mxu0 0
    %310 = vmatprep.subr.bf16.mxu0 0
    %311 = vmatpush2.bf16.msra.mxu0 0
    %312 = vmatprep.subr.bf16.mxu0 0
    %313 = vmatpush2.bf16.msra.mxu0 0
    %314 = vmatprep.subr.bf16.mxu0 0
    %315 = vmatpush2.bf16.msra.mxu0 0
    %316 = vmatprep.mubr.bf16.mxu0 0
    %317 = vmatmul.mubr.bf16.gmra.mxu0 %v282
    %v318 = vpop.f32.mrf.mxu0
    %v319 = vadd.f32 %v255, %v318
    %v320 = vpop.f32.mrf.mxu0
    %v321 = vpop.f32.mrf.mxu0
    %v322 = vadd.f32 %v255, %v321
    %v323 = vpop.f32.mrf.mxu0
    %324 = vdwg.mxu0
    %v325 = vtanh.pop %v319
    %v326 = vtanh.pop %v322
    %v327 = vstv %s59
    %v328 = vmul.f32 %v327, %v325
    %v329 = vmul.f32 %v327, %v326
    %330 = vst [vmem:[#allocation9] sm:$0xff] %v328
    %331 = vst [vmem:[#allocation9 + $0x8] sm:$0xff] %v329
    // Predicated region
    $region30: #{tpu_custom_call.1} parent=1 // pred_check
      _
    $region31: #{tpu_custom_call.1} parent=1 // pred_check_branch
      %333 = sbr.rel (0) target = $region33
    $region32: #{tpu_custom_call.1} parent=1 // pred_region
      %s335 = ssub.s32 256, 256
      %336 = vsyncadd [#allocation5], %s335
      %s337 = sshll.u32 [#allocation9], 4
      %s338 = int_to_ptr.vmem [resolvable:$true] %s337
      %343 = dma.vmem_to_hbm [thread:$0]  %s338, 256, %s4, [#allocation5], 128, 128, 8
    $region33: #{tpu_custom_call.1} parent=1 // pred_fallthru
      _
    // Predicated region
    $region34: #{tpu_custom_call.1} parent=1 // pred_check
      _
    $region35: #{tpu_custom_call.1} parent=1 // pred_check_branch
      %345 = sbr.rel (0) target = $region37
    $region36: #{tpu_custom_call.1} parent=1 // pred_region
      %346 = dma.done [#allocation5], 256
    $region37: #{tpu_custom_call.1} parent=1 // pred_fallthru
      _
    %347 = vsyncpa [#allocation4], 1
    %348 = vsyncpa [#allocation7], 1
    %349 = vsyncpa [#allocation5], 1

</llo_original>
